<compile_context>
chip_gen: v7x
topology: tpu7x:2x2x1
jax: 0.10.0
libtpu: 0.0.40
codegen_flags: <defaults>
</compile_context>

<pallas_src>
import functools

import jax
import jax.numpy as jnp
import numpy as np
from jax.experimental import pallas as pl
from jax.experimental.pallas import tpu as pltpu


def stsgcm_kernel(x_ref, adj_ref, w0_ref, b0_ref, w12_ref, b12_ref, o_ref,
                  *, n, half):
    """One grid step = `wps` sliding windows packed into the lane axis.

    Ref shapes (leading grid dim squeezed), G = wps * B:
      x_ref   : (3N, G*C)       bf16, columns indexed by (window, batch, chan)
      adj_ref : (3N, 3N)        bf16 (resident)
      w0_ref  : (G*C, 2*G*F)    bf16, block-diagonal over g = (window, batch)
      b0_ref  : (1, 2*G*F)      f32
      w12_ref : (2, G*F, 2*G*F) bf16
      b12_ref : (2, 1, 2*G*F)   f32
      o_ref   : (N, G*F)        f32  -- G*F is a multiple of 128 (lane-dense)
    """
    adj = adj_ref[...]                                      # (3N, 3N) bf16

    def gcn_glu(h_bf16, w_pack, bias):
        # graph aggregation + GLU linear on the MXU, f32 accumulation
        g = jnp.dot(adj, h_bf16, preferred_element_type=jnp.float32)
        z = jnp.dot(g.astype(jnp.bfloat16), w_pack,
                    preferred_element_type=jnp.float32) + bias
        lhs, rhs = z[:, :half], z[:, half:]
        # GLU gate: exp + reciprocal both go to the EUP slot (free vs VALU).
        return lhs * pl.reciprocal(1.0 + jnp.exp(-rhs), approx=True)

    h = gcn_glu(x_ref[...], w0_ref[...], b0_ref[...])       # layer 0 (Cin = C)
    m = h[n:2 * n, :]                                        # middle N vertices
    for l in range(2):                                       # layers 1, 2 (Cin = F)
        h = gcn_glu(h.astype(jnp.bfloat16), w12_ref[l], b12_ref[l])
        m = jnp.maximum(m, h[n:2 * n, :])
    o_ref[...] = m                                           # lane-dense store


def _pack_glu_params(w, bias, num_steps, wps, b_sz, f):
    """Pack per-window GLU Linears for (window, batch)-in-lanes execution.

    w: (nw, cin, 2F) (= PyTorch weight.T), bias: (nw, 2F).  Returns
      w_pack   : (num_steps, G*cin, 2*G*F) bf16, block-diagonal over g=(w, b);
                 lhs halves in columns [:G*F], rhs halves in [G*F:].
      bias_pack: (num_steps, 1, 2*G*F) f32 with matching column layout.
    """
    nw, cin, _ = w.shape
    g_sz = wps * b_sz
    w = w.reshape(num_steps, wps, cin, 2 * f)
    w_rep = jnp.repeat(w, b_sz, axis=1)                      # (ns, G, cin, 2F)
    eye_g = jnp.eye(g_sz, dtype=w.dtype)

    def blockdiag(part):                                     # (ns, G, cin, F)
        return jnp.einsum('sgcj,gh->sgchj', part, eye_g).reshape(
            num_steps, g_sz * cin, g_sz * f)

    w_pack = jnp.concatenate([blockdiag(w_rep[..., :f]),
                              blockdiag(w_rep[..., f:])], axis=-1)

    bias = bias.reshape(num_steps, wps, 2 * f)
    b_rep = jnp.repeat(bias, b_sz, axis=1)                   # (ns, G, 2F)
    bias_pack = jnp.concatenate(
        [b_rep[..., :f].reshape(num_steps, g_sz * f),
         b_rep[..., f:].reshape(num_steps, g_sz * f)], axis=-1
    ).reshape(num_steps, 1, 2 * g_sz * f)
    return w_pack.astype(jnp.bfloat16), bias_pack.astype(jnp.float32)


def stsgcn_layer_individual(data, adj, temporal_emb, spatial_emb,
                            weights, biases, *, n, f):
    """data: (B, T, N, C), adj: (3N, 3N) -> (B, T-2, N, F), matching PyTorch."""
    B, T, N, C = data.shape
    assert N == n
    nw = T - 2

    # 2 grid steps so v7x's two TensorCores each take half the windows; on
    # v5e/v6e they are just 2 cheap sequential steps (vs 4 before).
    num_steps = 2 if (nw >= 2 and nw % 2 == 0) else 1
    wps = nw // num_steps                    # windows packed per grid step
    G = wps * B

    # TODO(synk): for B >= 8 or much longer T the O(G^2 * F^2) packed weight
    # needs an extra grid axis over the 2*G*F output columns (v7x VMEM guard).

    # Position-embedding add + batch/window-into-lanes repack (tiny XLA ops).
    x = data + temporal_emb + spatial_emb                            # (B,T,N,C)
    x_t = jnp.transpose(x, (1, 2, 0, 3)).reshape(T, N, B * C)        # [t,v,b*C+c]
    idx = jnp.arange(nw)[:, None] + jnp.arange(3)[None, :]           # (nw, 3)
    x_slid = x_t[idx].reshape(num_steps, wps, 3, N, B * C)
    x_win = jnp.transpose(x_slid, (0, 2, 3, 1, 4)).reshape(
        num_steps, 3 * N, G * C).astype(jnp.bfloat16)                # pre-cast

    adj_bf = adj.astype(jnp.bfloat16)

    w0, w1, w2 = weights
    b0, b1, b2 = biases
    w0_p, b0_p = _pack_glu_params(w0, b0, num_steps, wps, B, f)
    w1_p, b1_p = _pack_glu_params(w1, b1, num_steps, wps, B, f)
    w2_p, b2_p = _pack_glu_params(w2, b2, num_steps, wps, B, f)
    w12_p = jnp.stack([w1_p, w2_p], axis=1)          # (ns, 2, G*F, 2*G*F)
    b12_p = jnp.stack([b1_p, b2_p], axis=1)          # (ns, 2, 1, 2*G*F)

    out = pl.pallas_call(
        functools.partial(stsgcm_kernel, n=N, half=G * f),
        out_shape=jax.ShapeDtypeStruct((num_steps, N, G * f), jnp.float32),
        grid=(num_steps,),
        in_specs=[
            pl.BlockSpec((None, 3 * N, G * C), lambda s: (s, 0, 0)),
            pl.BlockSpec((3 * N, 3 * N), lambda s: (0, 0)),           # resident
            pl.BlockSpec((None, G * C, 2 * G * f), lambda s: (s, 0, 0)),
            pl.BlockSpec((None, 1, 2 * G * f), lambda s: (s, 0, 0)),
            pl.BlockSpec((None, 2, G * f, 2 * G * f), lambda s: (s, 0, 0, 0)),
            pl.BlockSpec((None, 2, 1, 2 * G * f), lambda s: (s, 0, 0, 0)),
        ],
        out_specs=pl.BlockSpec((None, N, G * f), lambda s: (s, 0, 0)),
        compiler_params=pltpu.CompilerParams(
            dimension_semantics=("parallel",)),
    )(x_win, adj_bf, w0_p, b0_p, w12_p, b12_p)

    # out[s, v, w*B*F + b*F + j]  ->  (B, nw, N, F)
    out = out.reshape(num_steps, N, wps, B, f)
    return jnp.transpose(out, (3, 0, 2, 1, 4)).reshape(B, nw, N, f)


def reference(data, adj, temporal_emb, spatial_emb, weights, biases, *, n, f):
    """Pure-JAX f32 transcription of the PyTorch forward, for verification."""
    data = data + temporal_emb + spatial_emb
    B, T, N, C = data.shape
    w0, w1, w2 = weights
    b0, b1, b2 = biases
    outs = []
    for i in range(T - 2):
        h = data[:, i:i + 3].reshape(B, 3 * N, C)
        layer_params = [(w0[i], b0[i]), (w1[i], b1[i]), (w2[i], b2[i])]
        concat = []
        for (w, b) in layer_params:
            g = jnp.einsum('uv,bvc->buc', adj, h)
            z = jnp.einsum('buc,cf->buf', g, w) + b
            lhs, rhs = z[..., :f], z[..., f:]
            h = lhs * jax.nn.sigmoid(rhs)
            concat.append(jnp.transpose(h, (1, 0, 2))[N:2 * N])   # (N, B, F)
        m = jnp.max(jnp.stack(concat, axis=0), axis=0)            # (N, B, F)
        outs.append(jnp.transpose(m, (1, 0, 2))[:, None])         # (B, 1, N, F)
    return jnp.concatenate(outs, axis=1)


if __name__ == "__main__":
    # Small shapes consistent with the module:
    # batch B=2, input_length T=6, num_of_vertices N=16, num_of_features C=4,
    # filters=[32, 32, 32] (GLU activation) -> F=32, output (B, T-2, N, F)
    B, T, N, C, F = 2, 6, 16, 4, 32
    nw = T - 2

    key = jax.random.PRNGKey(0)
    keys = jax.random.split(key, 10)

    data = jax.random.normal(keys[0], (B, T, N, C), jnp.float32)
    adj = jax.random.uniform(keys[1], (3 * N, 3 * N), jnp.float32)
    adj = adj / jnp.sum(adj, axis=1, keepdims=True)   # row-normalized ST adjacency

    def xavier(k, shape):
        fan_in, fan_out = shape[-2], shape[-1]
        bound = float(np.sqrt(6.0 / (fan_in + fan_out)))
        return jax.random.uniform(k, shape, jnp.float32, -bound, bound)

    temporal_emb = xavier(keys[2], (1, T, 1, C))      # PositionEmbedding.temporal_emb
    spatial_emb = xavier(keys[3], (1, 1, N, C))       # PositionEmbedding.spatial_emb

    # Per-window (T-2 independent Stsgcm modules), 3 GLU GcnOperations each.
    # Linear weights stored as (in, out) == PyTorch weight.T; biases uniform.
    w0 = xavier(keys[4], (nw, C, 2 * F))
    w1 = xavier(keys[5], (nw, F, 2 * F))
    w2 = xavier(keys[6], (nw, F, 2 * F))
    b0 = jax.random.uniform(keys[7], (nw, 2 * F), jnp.float32, -0.1, 0.1)
    b1 = jax.random.uniform(keys[8], (nw, 2 * F), jnp.float32, -0.1, 0.1)
    b2 = jax.random.uniform(keys[9], (nw, 2 * F), jnp.float32, -0.1, 0.1)

    run = jax.jit(lambda d, a, te, se, ws, bs:
                  stsgcn_layer_individual(d, a, te, se, ws, bs, n=N, f=F))

    out = run(data, adj, temporal_emb, spatial_emb, (w0, w1, w2), (b0, b1, b2))
    out = jax.block_until_ready(out)

    ref = reference(data, adj, temporal_emb, spatial_emb,
                    (w0, w1, w2), (b0, b1, b2), n=N, f=F)

    assert out.shape == (B, nw, N, F), out.shape
    np.testing.assert_allclose(np.asarray(out), np.asarray(ref), rtol=2e-2, atol=2e-2)
    print("KERNEL_OK")
</pallas_src>

<mosaic_0001>
module attributes {stable_mosaic.version = 11 : i64} {
  func.func @stsgcm_kernel(%arg0: i32, %arg1: memref<1x48x16xbf16, #tpu.memory_space<vmem>>, %arg2: memref<48x48xbf16, #tpu.memory_space<vmem>>, %arg3: memref<1x16x256xbf16, #tpu.memory_space<vmem>>, %arg4: memref<1x1x256xf32, #tpu.memory_space<vmem>>, %arg5: memref<1x2x128x256xbf16, #tpu.memory_space<vmem>>, %arg6: memref<1x2x1x256xf32, #tpu.memory_space<vmem>>, %arg7: memref<1x16x128xf32, #tpu.memory_space<vmem>>) attributes {dimension_semantics = [#tpu.dimension_semantics<parallel>], iteration_bounds = array<i64: 2>, scalar_prefetch = 0 : i64, scratch_operands = 0 : i64, tpu.core_type = #tpu.core_type<tc>, window_params = [{transform_indices = @transform_0, window_bounds = array<i64: 1, 48, 16>}, {pipeline_mode = #tpu.pipeline_mode<synchronous>, transform_indices = @transform_1, window_bounds = array<i64: 48, 48>}, {transform_indices = @transform_2, window_bounds = array<i64: 1, 16, 256>}, {transform_indices = @transform_3, window_bounds = array<i64: 1, 1, 256>}, {transform_indices = @transform_4, window_bounds = array<i64: 1, 2, 128, 256>}, {transform_indices = @transform_5, window_bounds = array<i64: 1, 2, 1, 256>}, {transform_indices = @transform_6, window_bounds = array<i64: 1, 16, 128>}]} {
    %c0 = arith.constant 0 : index
    %c0_0 = arith.constant 0 : index
    %0 = vector.load %arg2[%c0, %c0_0] : memref<48x48xbf16, #tpu.memory_space<vmem>>, vector<48x48xbf16>
    %c0_1 = arith.constant 0 : index
    %c0_2 = arith.constant 0 : index
    %c0_3 = arith.constant 0 : index
    %1 = vector.load %arg1[%c0_1, %c0_2, %c0_3] : memref<1x48x16xbf16, #tpu.memory_space<vmem>>, vector<1x48x16xbf16>
    %2 = vector.shape_cast %1 : vector<1x48x16xbf16> to vector<48x16xbf16>
    %c0_4 = arith.constant 0 : index
    %c0_5 = arith.constant 0 : index
    %c0_6 = arith.constant 0 : index
    %3 = vector.load %arg3[%c0_4, %c0_5, %c0_6] : memref<1x16x256xbf16, #tpu.memory_space<vmem>>, vector<1x16x256xbf16>
    %4 = vector.shape_cast %3 : vector<1x16x256xbf16> to vector<16x256xbf16>
    %c0_7 = arith.constant 0 : index
    %c0_8 = arith.constant 0 : index
    %c0_9 = arith.constant 0 : index
    %5 = vector.load %arg4[%c0_7, %c0_8, %c0_9] : memref<1x1x256xf32, #tpu.memory_space<vmem>>, vector<1x1x256xf32>
    %6 = vector.shape_cast %5 : vector<1x1x256xf32> to vector<1x256xf32>
    %cst = arith.constant dense<0.000000e+00> : vector<48x16xf32>
    %7 = tpu.matmul %0, %2, %cst {dimension_numbers = #tpu.dot_dimension_numbers<[1], [0], [0], [1], [0, 0, 1, 1], [], []>} : vector<48x48xbf16>, vector<48x16xbf16>, vector<48x16xf32> -> vector<48x16xf32>
    %8 = arith.truncf %7 : vector<48x16xf32> to vector<48x16xbf16>
    %cst_10 = arith.constant dense<0.000000e+00> : vector<48x256xf32>
    %9 = tpu.matmul %8, %4, %cst_10 {dimension_numbers = #tpu.dot_dimension_numbers<[1], [0], [0], [1], [0, 0, 1, 1], [], []>} : vector<48x16xbf16>, vector<16x256xbf16>, vector<48x256xf32> -> vector<48x256xf32>
    %10 = vector.broadcast %6 : vector<1x256xf32> to vector<48x256xf32>
    %11 = arith.addf %9, %10 : vector<48x256xf32>
    %12 = vector.extract_strided_slice %11 {offsets = [0, 0], sizes = [48, 128], strides = [1, 1]} : vector<48x256xf32> to vector<48x128xf32>
    %13 = vector.extract_strided_slice %11 {offsets = [0, 128], sizes = [48, 128], strides = [1, 1]} : vector<48x256xf32> to vector<48x128xf32>
    %cst_11 = arith.constant 0.000000e+00 : f32
    %14 = vector.broadcast %cst_11 : f32 to vector<48x128xf32>
    %15 = arith.subf %14, %13 : vector<48x128xf32>
    %16 = math.exp %15 : vector<48x128xf32>
    %cst_12 = arith.constant 1.000000e+00 : f32
    %17 = vector.broadcast %cst_12 : f32 to vector<48x128xf32>
    %18 = arith.addf %17, %16 : vector<48x128xf32>
    %19 = tpu.reciprocal %18 {approx = true} : vector<48x128xf32> -> vector<48x128xf32>
    %20 = arith.mulf %12, %19 : vector<48x128xf32>
    %21 = vector.extract_strided_slice %20 {offsets = [16, 0], sizes = [16, 128], strides = [1, 1]} : vector<48x128xf32> to vector<16x128xf32>
    %22 = arith.truncf %20 : vector<48x128xf32> to vector<48x128xbf16>
    %c0_13 = arith.constant 0 : index
    %c0_14 = arith.constant 0 : index
    %c0_15 = arith.constant 0 : index
    %c0_16 = arith.constant 0 : index
    %23 = vector.load %arg5[%c0_13, %c0_14, %c0_15, %c0_16] : memref<1x2x128x256xbf16, #tpu.memory_space<vmem>>, vector<1x1x128x256xbf16>
    %24 = vector.shape_cast %23 : vector<1x1x128x256xbf16> to vector<128x256xbf16>
    %c0_17 = arith.constant 0 : index
    %c0_18 = arith.constant 0 : index
    %c0_19 = arith.constant 0 : index
    %c0_20 = arith.constant 0 : index
    %25 = vector.load %arg6[%c0_17, %c0_18, %c0_19, %c0_20] : memref<1x2x1x256xf32, #tpu.memory_space<vmem>>, vector<1x1x1x256xf32>
    %26 = vector.shape_cast %25 : vector<1x1x1x256xf32> to vector<1x256xf32>
    %cst_21 = arith.constant dense<0.000000e+00> : vector<48x128xf32>
    %27 = tpu.matmul %0, %22, %cst_21 {dimension_numbers = #tpu.dot_dimension_numbers<[1], [0], [0], [1], [0, 0, 1, 1], [], []>} : vector<48x48xbf16>, vector<48x128xbf16>, vector<48x128xf32> -> vector<48x128xf32>
    %28 = arith.truncf %27 : vector<48x128xf32> to vector<48x128xbf16>
    %cst_22 = arith.constant dense<0.000000e+00> : vector<48x256xf32>
    %29 = tpu.matmul %28, %24, %cst_22 {dimension_numbers = #tpu.dot_dimension_numbers<[1], [0], [0], [1], [0, 0, 1, 1], [], []>} : vector<48x128xbf16>, vector<128x256xbf16>, vector<48x256xf32> -> vector<48x256xf32>
    %30 = vector.broadcast %26 : vector<1x256xf32> to vector<48x256xf32>
    %31 = arith.addf %29, %30 : vector<48x256xf32>
    %32 = vector.extract_strided_slice %31 {offsets = [0, 0], sizes = [48, 128], strides = [1, 1]} : vector<48x256xf32> to vector<48x128xf32>
    %33 = vector.extract_strided_slice %31 {offsets = [0, 128], sizes = [48, 128], strides = [1, 1]} : vector<48x256xf32> to vector<48x128xf32>
    %cst_23 = arith.constant 0.000000e+00 : f32
    %34 = vector.broadcast %cst_23 : f32 to vector<48x128xf32>
    %35 = arith.subf %34, %33 : vector<48x128xf32>
    %36 = math.exp %35 : vector<48x128xf32>
    %cst_24 = arith.constant 1.000000e+00 : f32
    %37 = vector.broadcast %cst_24 : f32 to vector<48x128xf32>
    %38 = arith.addf %37, %36 : vector<48x128xf32>
    %39 = tpu.reciprocal %38 {approx = true} : vector<48x128xf32> -> vector<48x128xf32>
    %40 = arith.mulf %32, %39 : vector<48x128xf32>
    %41 = vector.extract_strided_slice %40 {offsets = [16, 0], sizes = [16, 128], strides = [1, 1]} : vector<48x128xf32> to vector<16x128xf32>
    %42 = arith.maximumf %21, %41 : vector<16x128xf32>
    %43 = arith.truncf %40 : vector<48x128xf32> to vector<48x128xbf16>
    %c0_25 = arith.constant 0 : index
    %c1 = arith.constant 1 : index
    %c0_26 = arith.constant 0 : index
    %c0_27 = arith.constant 0 : index
    %44 = vector.load %arg5[%c0_25, %c1, %c0_26, %c0_27] : memref<1x2x128x256xbf16, #tpu.memory_space<vmem>>, vector<1x1x128x256xbf16>
    %45 = vector.shape_cast %44 : vector<1x1x128x256xbf16> to vector<128x256xbf16>
    %c0_28 = arith.constant 0 : index
    %c1_29 = arith.constant 1 : index
    %c0_30 = arith.constant 0 : index
    %c0_31 = arith.constant 0 : index
    %46 = vector.load %arg6[%c0_28, %c1_29, %c0_30, %c0_31] : memref<1x2x1x256xf32, #tpu.memory_space<vmem>>, vector<1x1x1x256xf32>
    %47 = vector.shape_cast %46 : vector<1x1x1x256xf32> to vector<1x256xf32>
    %cst_32 = arith.constant dense<0.000000e+00> : vector<48x128xf32>
    %48 = tpu.matmul %0, %43, %cst_32 {dimension_numbers = #tpu.dot_dimension_numbers<[1], [0], [0], [1], [0, 0, 1, 1], [], []>} : vector<48x48xbf16>, vector<48x128xbf16>, vector<48x128xf32> -> vector<48x128xf32>
    %49 = arith.truncf %48 : vector<48x128xf32> to vector<48x128xbf16>
    %cst_33 = arith.constant dense<0.000000e+00> : vector<48x256xf32>
    %50 = tpu.matmul %49, %45, %cst_33 {dimension_numbers = #tpu.dot_dimension_numbers<[1], [0], [0], [1], [0, 0, 1, 1], [], []>} : vector<48x128xbf16>, vector<128x256xbf16>, vector<48x256xf32> -> vector<48x256xf32>
    %51 = vector.broadcast %47 : vector<1x256xf32> to vector<48x256xf32>
    %52 = arith.addf %50, %51 : vector<48x256xf32>
    %53 = vector.extract_strided_slice %52 {offsets = [0, 0], sizes = [48, 128], strides = [1, 1]} : vector<48x256xf32> to vector<48x128xf32>
    %54 = vector.extract_strided_slice %52 {offsets = [0, 128], sizes = [48, 128], strides = [1, 1]} : vector<48x256xf32> to vector<48x128xf32>
    %cst_34 = arith.constant 0.000000e+00 : f32
    %55 = vector.broadcast %cst_34 : f32 to vector<48x128xf32>
    %56 = arith.subf %55, %54 : vector<48x128xf32>
    %57 = math.exp %56 : vector<48x128xf32>
    %cst_35 = arith.constant 1.000000e+00 : f32
    %58 = vector.broadcast %cst_35 : f32 to vector<48x128xf32>
    %59 = arith.addf %58, %57 : vector<48x128xf32>
    %60 = tpu.reciprocal %59 {approx = true} : vector<48x128xf32> -> vector<48x128xf32>
    %61 = arith.mulf %53, %60 : vector<48x128xf32>
    %62 = vector.extract_strided_slice %61 {offsets = [16, 0], sizes = [16, 128], strides = [1, 1]} : vector<48x128xf32> to vector<16x128xf32>
    %63 = arith.maximumf %42, %62 : vector<16x128xf32>
    %c0_36 = arith.constant 0 : index
    %c0_37 = arith.constant 0 : index
    %c0_38 = arith.constant 0 : index
    %64 = vector.load %arg7[%c0_36, %c0_37, %c0_38] : memref<1x16x128xf32, #tpu.memory_space<vmem>>, vector<1x16x128xf32>
    %65 = vector.shape_cast %64 : vector<1x16x128xf32> to vector<16x128xf32>
    %66 = vector.shape_cast %63 : vector<16x128xf32> to vector<1x16x128xf32>
    tpu.vector_store %arg7[%c0_36, %c0_37, %c0_38], %66 {strides = array<i32>} : memref<1x16x128xf32, #tpu.memory_space<vmem>>, vector<1x16x128xf32>,
    return
  }
  func.func @transform_0(%arg0: i32) -> (i32, i32, i32) {
    %c0_i32 = arith.constant 0 : i32
    %c0_i32_0 = arith.constant 0 : i32
    %c0_i32_1 = arith.constant 0 : i32
    return %arg0, %c0_i32, %c0_i32_0 : i32, i32, i32
  }
  func.func @transform_1(%arg0: i32) -> (i32, i32) {
    %c0_i32 = arith.constant 0 : i32
    %c0_i32_0 = arith.constant 0 : i32
    %c0_i32_1 = arith.constant 0 : i32
    return %c0_i32, %c0_i32_0 : i32, i32
  }
  func.func @transform_2(%arg0: i32) -> (i32, i32, i32) {
    %c0_i32 = arith.constant 0 : i32
    %c0_i32_0 = arith.constant 0 : i32
    %c0_i32_1 = arith.constant 0 : i32
    return %arg0, %c0_i32, %c0_i32_0 : i32, i32, i32
  }
  func.func @transform_3(%arg0: i32) -> (i32, i32, i32) {
    %c0_i32 = arith.constant 0 : i32
    %c0_i32_0 = arith.constant 0 : i32
    %c0_i32_1 = arith.constant 0 : i32
    return %arg0, %c0_i32, %c0_i32_0 : i32, i32, i32
  }
  func.func @transform_4(%arg0: i32) -> (i32, i32, i32, i32) {
    %c0_i32 = arith.constant 0 : i32
    %c0_i32_0 = arith.constant 0 : i32
    %c0_i32_1 = arith.constant 0 : i32
    %c0_i32_2 = arith.constant 0 : i32
    return %arg0, %c0_i32, %c0_i32_0, %c0_i32_1 : i32, i32, i32, i32
  }
  func.func @transform_5(%arg0: i32) -> (i32, i32, i32, i32) {
    %c0_i32 = arith.constant 0 : i32
    %c0_i32_0 = arith.constant 0 : i32
    %c0_i32_1 = arith.constant 0 : i32
    %c0_i32_2 = arith.constant 0 : i32
    return %arg0, %c0_i32, %c0_i32_0, %c0_i32_1 : i32, i32, i32, i32
  }
  func.func @transform_6(%arg0: i32) -> (i32, i32, i32) {
    %c0_i32 = arith.constant 0 : i32
    %c0_i32_0 = arith.constant 0 : i32
    %c0_i32_1 = arith.constant 0 : i32
    return %arg0, %c0_i32, %c0_i32_0 : i32, i32, i32
  }
}

</mosaic_0001>

<llo_original>
// kernel: _lambda_.1
$region0: #{_lambda_.1}
  #allocation0 [shape = 'u32[]', space=smem, size = 0x4, offset = 0x4, fixed_abs, tag = 'smem constant byte address 0x4 - core index']
  #allocation1 [shape = 'u32[144,128]{1,0:T(1,128)}', space=vmem, size = 0x12000, scoped, tag = 'internal scratch']
  %s0 = inlined_call_operand.vmem [shape: bf16[2,48,16], index: 0, kind: input, shape index: {}]
  %s1 = inlined_call_operand.vmem [shape: bf16[48,48], index: 1, kind: input, shape index: {}]
  %s2 = inlined_call_operand.vmem [shape: bf16[2,16,256], index: 2, kind: input, shape index: {}]
  %s3 = inlined_call_operand.vmem [shape: f32[2,1,256], index: 3, kind: input, shape index: {}]
  %s4 = inlined_call_operand.vmem [shape: bf16[2,2,128,256], index: 4, kind: input, shape index: {}]
  %s5 = inlined_call_operand.vmem [shape: f32[2,2,1,256], index: 5, kind: input, shape index: {}]
  %s6 = inlined_call_operand.vmem [shape: f32[2,16,128], index: 6, kind: output, shape index: {}]
  %s7 = sld [smem:[#allocation0]]
  $region57: #{_lambda_.1} parent=0
    _
  %s9 = ssub.s32 1, %s7
  %s10 = scalar_select 0, %s9, %s7
  loop: start=0, step=1, limit=4
  $region2: #{_lambda_.1} parent=0 // loop_pre_header
    _
  $region3: #{_lambda_.1} parent=0 // loop_header
    %s12 = sphi 0, %s16
    %p13 = scmp.ge.s32.totalorder %s12, 4
    %s22 = sphi 0, %s24
    %s25 = sphi 0, %s22
    %s26 = sphi 0, %s25
    %s42 = sphi 0, %s26
    %s46 = sphi 0, %s46
    %s48 = sphi 0, %s46
    %s49 = sphi 0, %s48
    %s63 = sphi 0, %s49
    %s69 = sphi 0, %s71
    %s72 = sphi 0, %s69
    %s73 = sphi 0, %s72
    %s89 = sphi 0, %s73
    %s95 = sphi 0, %s97
    %s98 = sphi 0, %s95
    %s99 = sphi 0, %s98
    %s115 = sphi 0, %s99
    %s121 = sphi 0, %s123
    %s124 = sphi 0, %s121
    %s125 = sphi 0, %s124
    %s141 = sphi 0, %s125
    %s147 = sphi 0, %s149
    %s150 = sphi 0, %s147
    %s151 = sphi 0, %s150
    %s167 = sphi 0, %s151
    %s173 = sphi 0, %s175
    %s176 = sphi 0, %s173
    %s177 = sphi 0, %s176
    %s193 = sphi 0, %s177
  $region4: #{_lambda_.1} parent=0 // loop_header_branch
    %15 = sbr.rel (%p13) target = $region8
  $region5: #{_lambda_.1} parent=0 // loop_body
    %s17 = ssub.s32 %s12, 1
    %s18 = ssub.s32 %s12, 2
    %s19 = sadd.s32 %s12, 1
    %s20 = ssub.s32 %s12, %s19
    %p21 = scmp.eq.s32.totalorder %s20, 0
    %s23 = sadd.s32 %s22, 1
    %s24 = scalar_select %p21, %s22, %s23
    %p27 = pneg %p21
    %p28 = scmp.eq.s32.totalorder %s12, 1
    %p29 = por %p27, %p28
    %p30 = scmp.ne.s32.totalorder %s22, %s25
    %p31 = scmp.eq.s32.totalorder %s12, 0
    %p32 = por %p30, %p31
    %p33 = scmp.ne.s32.totalorder %s22, %s25
    %p34 = scmp.eq.s32.totalorder %s17, 1
    %p35 = por %p33, %p34
    %p36 = scmp.ne.s32.totalorder %s25, %s26
    %p37 = scmp.eq.s32.totalorder %s17, 0
    %p38 = por %p36, %p37
    %p39 = scmp.ne.s32.totalorder %s25, %s26
    %p40 = scmp.eq.s32.totalorder %s18, 1
    %p41 = por %p39, %p40
    %p43 = scmp.ne.s32.totalorder %s26, %s42
    %p44 = scmp.eq.s32.totalorder %s18, 0
    %p45 = por %p43, %p44
    %s47 = sadd.s32 %s46, 1
    %p50 = scmp.eq.s32.totalorder %s12, 1
    %p51 = scmp.ne.s32.totalorder %s46, %s48
    %p52 = scmp.eq.s32.totalorder %s12, 0
    %p53 = por %p51, %p52
    %p54 = scmp.ne.s32.totalorder %s46, %s48
    %p55 = scmp.eq.s32.totalorder %s17, 1
    %p56 = por %p54, %p55
    %p57 = scmp.ne.s32.totalorder %s48, %s49
    %p58 = scmp.eq.s32.totalorder %s17, 0
    %p59 = por %p57, %p58
    %p60 = scmp.ne.s32.totalorder %s48, %s49
    %p61 = scmp.eq.s32.totalorder %s18, 1
    %p62 = por %p60, %p61
    %p64 = scmp.ne.s32.totalorder %s49, %s63
    %p65 = scmp.eq.s32.totalorder %s18, 0
    %p66 = por %p64, %p65
    %s67 = ssub.s32 %s12, %s19
    %p68 = scmp.eq.s32.totalorder %s67, 0
    %s70 = sadd.s32 %s69, 1
    %s71 = scalar_select %p68, %s69, %s70
    %p74 = pneg %p68
    %p75 = scmp.eq.s32.totalorder %s12, 1
    %p76 = por %p74, %p75
    %p77 = scmp.ne.s32.totalorder %s69, %s72
    %p78 = scmp.eq.s32.totalorder %s12, 0
    %p79 = por %p77, %p78
    %p80 = scmp.ne.s32.totalorder %s69, %s72
    %p81 = scmp.eq.s32.totalorder %s17, 1
    %p82 = por %p80, %p81
    %p83 = scmp.ne.s32.totalorder %s72, %s73
    %p84 = scmp.eq.s32.totalorder %s17, 0
    %p85 = por %p83, %p84
    %p86 = scmp.ne.s32.totalorder %s72, %s73
    %p87 = scmp.eq.s32.totalorder %s18, 1
    %p88 = por %p86, %p87
    %p90 = scmp.ne.s32.totalorder %s73, %s89
    %p91 = scmp.eq.s32.totalorder %s18, 0
    %p92 = por %p90, %p91
    %s93 = ssub.s32 %s12, %s19
    %p94 = scmp.eq.s32.totalorder %s93, 0
    %s96 = sadd.s32 %s95, 1
    %s97 = scalar_select %p94, %s95, %s96
    %p100 = pneg %p94
    %p101 = scmp.eq.s32.totalorder %s12, 1
    %p102 = por %p100, %p101
    %p103 = scmp.ne.s32.totalorder %s95, %s98
    %p104 = scmp.eq.s32.totalorder %s12, 0
    %p105 = por %p103, %p104
    %p106 = scmp.ne.s32.totalorder %s95, %s98
    %p107 = scmp.eq.s32.totalorder %s17, 1
    %p108 = por %p106, %p107
    %p109 = scmp.ne.s32.totalorder %s98, %s99
    %p110 = scmp.eq.s32.totalorder %s17, 0
    %p111 = por %p109, %p110
    %p112 = scmp.ne.s32.totalorder %s98, %s99
    %p113 = scmp.eq.s32.totalorder %s18, 1
    %p114 = por %p112, %p113
    %p116 = scmp.ne.s32.totalorder %s99, %s115
    %p117 = scmp.eq.s32.totalorder %s18, 0
    %p118 = por %p116, %p117
    %s119 = ssub.s32 %s12, %s19
    %p120 = scmp.eq.s32.totalorder %s119, 0
    %s122 = sadd.s32 %s121, 1
    %s123 = scalar_select %p120, %s121, %s122
    %p126 = pneg %p120
    %p127 = scmp.eq.s32.totalorder %s12, 1
    %p128 = por %p126, %p127
    %p129 = scmp.ne.s32.totalorder %s121, %s124
    %p130 = scmp.eq.s32.totalorder %s12, 0
    %p131 = por %p129, %p130
    %p132 = scmp.ne.s32.totalorder %s121, %s124
    %p133 = scmp.eq.s32.totalorder %s17, 1
    %p134 = por %p132, %p133
    %p135 = scmp.ne.s32.totalorder %s124, %s125
    %p136 = scmp.eq.s32.totalorder %s17, 0
    %p137 = por %p135, %p136
    %p138 = scmp.ne.s32.totalorder %s124, %s125
    %p139 = scmp.eq.s32.totalorder %s18, 1
    %p140 = por %p138, %p139
    %p142 = scmp.ne.s32.totalorder %s125, %s141
    %p143 = scmp.eq.s32.totalorder %s18, 0
    %p144 = por %p142, %p143
    %s145 = ssub.s32 %s12, %s19
    %p146 = scmp.eq.s32.totalorder %s145, 0
    %s148 = sadd.s32 %s147, 1
    %s149 = scalar_select %p146, %s147, %s148
    %p152 = pneg %p146
    %p153 = scmp.eq.s32.totalorder %s12, 1
    %p154 = por %p152, %p153
    %p155 = scmp.ne.s32.totalorder %s147, %s150
    %p156 = scmp.eq.s32.totalorder %s12, 0
    %p157 = por %p155, %p156
    %p158 = scmp.ne.s32.totalorder %s147, %s150
    %p159 = scmp.eq.s32.totalorder %s17, 1
    %p160 = por %p158, %p159
    %p161 = scmp.ne.s32.totalorder %s150, %s151
    %p162 = scmp.eq.s32.totalorder %s17, 0
    %p163 = por %p161, %p162
    %p164 = scmp.ne.s32.totalorder %s150, %s151
    %p165 = scmp.eq.s32.totalorder %s18, 1
    %p166 = por %p164, %p165
    %p168 = scmp.ne.s32.totalorder %s151, %s167
    %p169 = scmp.eq.s32.totalorder %s18, 0
    %p170 = por %p168, %p169
    %s171 = ssub.s32 %s12, %s19
    %p172 = scmp.eq.s32.totalorder %s171, 0
    %s174 = sadd.s32 %s173, 1
    %s175 = scalar_select %p172, %s173, %s174
    %p178 = pneg %p172
    %p179 = scmp.eq.s32.totalorder %s12, 1
    %p180 = por %p178, %p179
    %p181 = scmp.ne.s32.totalorder %s173, %s176
    %p182 = scmp.eq.s32.totalorder %s12, 0
    %p183 = por %p181, %p182
    %p184 = scmp.ne.s32.totalorder %s173, %s176
    %p185 = scmp.eq.s32.totalorder %s17, 1
    %p186 = por %p184, %p185
    %p187 = scmp.ne.s32.totalorder %s176, %s177
    %p188 = scmp.eq.s32.totalorder %s17, 0
    %p189 = por %p187, %p188
    %p190 = scmp.ne.s32.totalorder %s176, %s177
    %p191 = scmp.eq.s32.totalorder %s18, 1
    %p192 = por %p190, %p191
    %p194 = scmp.ne.s32.totalorder %s177, %s193
    %p195 = scmp.eq.s32.totalorder %s18, 0
    %p196 = por %p194, %p195
    %p197 = scmp.le.s32.totalorder 1, %s12
    %p198 = scmp.lt.s32.totalorder %s12, 3
    %p199 = pnand %p197, %p198
    %p200 = pneg %p199
    // Predicated region
    $region9: #{_lambda_.1} parent=5 // pred_check
      _
    $region10: #{_lambda_.1} parent=5 // pred_check_branch
      %202 = sbr.rel (%p199) target = $region12
    $region11: #{_lambda_.1} parent=5 // pred_region
      %s203 = ssub.s32 %s12, 1
      // Predicated region
      $region13: #{_lambda_.1} parent=11 // pred_check
        %p204 = pneg %p59
      $region14: #{_lambda_.1} parent=11 // pred_check_branch
        %206 = sbr.rel (%p204) target = $region16
      $region15: #{_lambda_.1} parent=11 // pred_region
        _
      $region16: #{_lambda_.1} parent=11 // pred_fallthru
        _
    $region12: #{_lambda_.1} parent=5 // pred_fallthru
      _
    %p207 = scmp.lt.s32.totalorder %s12, 2
    // Predicated region
    $region17: #{_lambda_.1} parent=5 // pred_check
      %p208 = pneg %p207
    $region18: #{_lambda_.1} parent=5 // pred_check_branch
      %210 = sbr.rel (%p208) target = $region20
    $region19: #{_lambda_.1} parent=5 // pred_region
      // Predicated region
      $region21: #{_lambda_.1} parent=19 // pred_check
        %p211 = pneg %p32
      $region22: #{_lambda_.1} parent=19 // pred_check_branch
        %213 = sbr.rel (%p211) target = $region24
      $region23: #{_lambda_.1} parent=19 // pred_region
        %p214 = scmp.lt.s32.totalorder %s12, 1
        %s215 = scalar_select %p214, %s12, 1
        %s216 = smul.addr %s215, 6
        %s217 = smul.addr %s216, 4
        %s218 = scalar_lea.vmem %s0, %s217
      $region24: #{_lambda_.1} parent=19 // pred_fallthru
        _
      // Predicated region
      $region25: #{_lambda_.1} parent=19 // pred_check
        %p219 = pneg %p79
      $region26: #{_lambda_.1} parent=19 // pred_check_branch
        %221 = sbr.rel (%p219) target = $region28
      $region27: #{_lambda_.1} parent=19 // pred_region
        %p222 = scmp.lt.s32.totalorder %s12, 1
        %s223 = scalar_select %p222, %s12, 1
        %s224 = smul.addr %s223, 4
        %s225 = smul.addr %s224, 4
        %s226 = scalar_lea.vmem %s2, %s225
      $region28: #{_lambda_.1} parent=19 // pred_fallthru
        _
      // Predicated region
      $region29: #{_lambda_.1} parent=19 // pred_check
        %p227 = pneg %p105
      $region30: #{_lambda_.1} parent=19 // pred_check_branch
        %229 = sbr.rel (%p227) target = $region32
      $region31: #{_lambda_.1} parent=19 // pred_region
        %p230 = scmp.lt.s32.totalorder %s12, 1
        %s231 = scalar_select %p230, %s12, 1
        %s232 = smul.addr %s231, 2
        %s233 = scalar_lea.vmem %s3, %s232
      $region32: #{_lambda_.1} parent=19 // pred_fallthru
        _
      // Predicated region
      $region33: #{_lambda_.1} parent=19 // pred_check
        %p234 = pneg %p131
      $region34: #{_lambda_.1} parent=19 // pred_check_branch
        %236 = sbr.rel (%p234) target = $region36
      $region35: #{_lambda_.1} parent=19 // pred_region
        %p237 = scmp.lt.s32.totalorder %s12, 1
        %s238 = scalar_select %p237, %s12, 1
        %s239 = smul.addr %s238, 64
        %s240 = smul.addr %s239, 4
        %s241 = scalar_lea.vmem %s4, %s240
      $region36: #{_lambda_.1} parent=19 // pred_fallthru
        _
      // Predicated region
      $region37: #{_lambda_.1} parent=19 // pred_check
        %p242 = pneg %p157
      $region38: #{_lambda_.1} parent=19 // pred_check_branch
        %244 = sbr.rel (%p242) target = $region40
      $region39: #{_lambda_.1} parent=19 // pred_region
        %p245 = scmp.lt.s32.totalorder %s12, 1
        %s246 = scalar_select %p245, %s12, 1
        %s247 = smul.addr %s246, 4
        %s248 = scalar_lea.vmem %s5, %s247
      $region40: #{_lambda_.1} parent=19 // pred_fallthru
        _
    $region20: #{_lambda_.1} parent=5 // pred_fallthru
      _
    %p249 = scmp.le.s32.totalorder 1, %s12
    %p250 = scmp.lt.s32.totalorder %s12, 3
    %p251 = pnand %p249, %p250
    %p252 = pneg %p251
    // Predicated region
    $region41: #{_lambda_.1} parent=5 // pred_check
      _
    $region42: #{_lambda_.1} parent=5 // pred_check_branch
      %254 = sbr.rel (%p251) target = $region44
    $region43: #{_lambda_.1} parent=5 // pred_region
      %s255 = ssub.s32 %s12, 1
      %p256 = scmp.lt.s32.totalorder %s17, 1
      %s257 = scalar_select %p256, %s17, 1
      %s258 = smul.addr %s257, 6
      %s259 = smul.addr %s258, 4
      %s260 = scalar_lea.vmem %s0, %s259
      %p261 = pneg %p38
      %p262 = pneg %p35
      %p263 = pneg %p59
      %p264 = pneg %p56
      %p265 = scmp.lt.s32.totalorder %s17, 1
      %s266 = scalar_select %p265, %s17, 1
      %s267 = smul.addr %s266, 4
      %s268 = smul.addr %s267, 4
      %s269 = scalar_lea.vmem %s2, %s268
      %p270 = pneg %p85
      %p271 = pneg %p82
      %p272 = scmp.lt.s32.totalorder %s17, 1
      %s273 = scalar_select %p272, %s17, 1
      %s274 = smul.addr %s273, 2
      %s275 = scalar_lea.vmem %s3, %s274
      %p276 = pneg %p111
      %p277 = pneg %p108
      %p278 = scmp.lt.s32.totalorder %s17, 1
      %s279 = scalar_select %p278, %s17, 1
      %s280 = smul.addr %s279, 64
      %s281 = smul.addr %s280, 4
      %s282 = scalar_lea.vmem %s4, %s281
      %p283 = pneg %p137
      %p284 = pneg %p134
      %p285 = scmp.lt.s32.totalorder %s17, 1
      %s286 = scalar_select %p285, %s17, 1
      %s287 = smul.addr %s286, 4
      %s288 = scalar_lea.vmem %s5, %s287
      %p289 = pneg %p163
      %p290 = pneg %p160
      %p291 = pneg %p189
      %p292 = pneg %p186
      %p293 = scmp.lt.s32.totalorder %s17, 1
      %s294 = scalar_select %p293, %s17, 1
      %s295 = smul.addr %s294, 2
      %s296 = smul.addr %s295, 8
      %s297 = scalar_lea.vmem %s6, %s296
      %p298 = scmp.lt.s32.totalorder %s17, 1
      %s299 = scalar_select %p298, %s17, 1
      %s300 = smul.addr %s299, 6
      %s301 = smul.addr %s300, 4
      %s302 = scalar_lea.vmem %s0, %s301
      %p303 = scmp.lt.s32.totalorder %s17, 1
      %s304 = scalar_select %p303, %s17, 1
      %s305 = smul.addr %s304, 4
      %s306 = smul.addr %s305, 4
      %s307 = scalar_lea.vmem %s2, %s306
      %p308 = scmp.lt.s32.totalorder %s17, 1
      %s309 = scalar_select %p308, %s17, 1
      %s310 = smul.addr %s309, 2
      %s311 = scalar_lea.vmem %s3, %s310
      %p312 = scmp.lt.s32.totalorder %s17, 1
      %s313 = scalar_select %p312, %s17, 1
      %s314 = smul.addr %s313, 64
      %s315 = smul.addr %s314, 4
      %s316 = scalar_lea.vmem %s4, %s315
      %p317 = scmp.lt.s32.totalorder %s17, 1
      %s318 = scalar_select %p317, %s17, 1
      %s319 = smul.addr %s318, 4
      %s320 = scalar_lea.vmem %s5, %s319
      %p321 = scmp.lt.s32.totalorder %s17, 1
      %s322 = scalar_select %p321, %s17, 1
      %s323 = smul.addr %s322, 2
      %s324 = smul.addr %s323, 8
      %s325 = scalar_lea.vmem %s6, %s324
      %v327 = vld [vmem:[%s1] sm:$0xf]
      %v328 = vld [vmem:[%s1 + $0x4] sm:$0xf]
      %v329 = vld [vmem:[%s1 + $0x8] sm:$0xf]
      %v330 = vld [vmem:[%s1 + $0xc] sm:$0xf]
      %v331 = vld [vmem:[%s1 + $0x10] sm:$0xf]
      %v332 = vld [vmem:[%s1 + $0x14] sm:$0xf]
      %v333 = vld [vmem:[%s302] sm:$0xf]
      %v334 = vld [vmem:[%s302 + $0x4] sm:$0xf]
      %v335 = vld [vmem:[%s302 + $0x8] sm:$0xf]
      %v336 = vld [vmem:[%s302 + $0xc] sm:$0xf]
      %v337 = vld [vmem:[%s302 + $0x10] sm:$0xf]
      %v338 = vld [vmem:[%s302 + $0x14] sm:$0xf]
      %v339 = vld [vmem:[%s307] sm:$0xff]
      %v340 = vld [vmem:[%s307 + $0x8] sm:$0xff]
      %v341 = vld [vmem:[%s311] sm:$0x3]
      %v348 = vunpack.c.l.b16 %v327
      %v349 = vunpack.c.l.b16 %v328
      %v350 = vunpack.c.l.b16 %v329
      %v351 = vunpack.c.l.b16 %v330
      %v352 = vunpack.c.l.b16 %v331
      %v353 = vunpack.c.l.b16 %v332
      %v354 = vpack.c.b16 %v349, %v348
      %v355 = vpack.c.b16 %v351, %v350
      %v356 = vpack.c.b16 %v353, %v352
      %v363 = vunpack.c.l.b16 %v333
      %v364 = vunpack.c.l.b16 %v334
      %v365 = vunpack.c.l.b16 %v335
      %v366 = vunpack.c.l.b16 %v336
      %v367 = vunpack.c.l.b16 %v337
      %v368 = vunpack.c.l.b16 %v338
      %v369 = vpack.c.b16 %v364, %v363
      %v370 = vpack.c.b16 %v366, %v365
      %v371 = vpack.c.b16 %v368, %v367
      %vm375 = vcmask 392192
      %v377 = vsel %vm375, %v354, 0
      %v380 = vsel %vm375, %v355, 0
      %v383 = vsel %vm375, %v356, 0
      %385 = vmatprep.subr.bf16.mxu0 0
      %386 = vmatpush1.bf16.msra.mxu0 %v369
      %387 = vmatprep.subr.bf16.mxu0 0
      %388 = vmatpush1.bf16.msra.mxu0 %v370
      %389 = vmatprep.subr.bf16.mxu0 0
      %390 = vmatpush1.bf16.msra.mxu0 %v371
      %391 = vmatprep.subr.bf16.mxu0 0
      %392 = vmatpush1.bf16.msra.mxu0 0
      %393 = vmatprep.subr.bf16.mxu0 0
      %394 = vmatpush1.bf16.msra.mxu0 0
      %395 = vmatprep.subr.bf16.mxu0 0
      %396 = vmatpush1.bf16.msra.mxu0 0
      %397 = vmatprep.subr.bf16.mxu0 0
      %398 = vmatpush1.bf16.msra.mxu0 0
      %399 = vmatprep.subr.bf16.mxu0 0
      %400 = vmatpush1.bf16.msra.mxu0 0
      %401 = vmatprep.subr.bf16.mxu0 0
      %402 = vmatpush1.bf16.msra.mxu0 0
      %403 = vmatprep.subr.bf16.mxu0 0
      %404 = vmatpush1.bf16.msra.mxu0 0
      %405 = vmatprep.subr.bf16.mxu0 0
      %406 = vmatpush1.bf16.msra.mxu0 0
      %407 = vmatprep.subr.bf16.mxu0 0
      %408 = vmatpush1.bf16.msra.mxu0 0
      %409 = vmatprep.subr.bf16.mxu0 0
      %410 = vmatpush1.bf16.msra.mxu0 0
      %411 = vmatprep.subr.bf16.mxu0 0
      %412 = vmatpush1.bf16.msra.mxu0 0
      %413 = vmatprep.subr.bf16.mxu0 0
      %414 = vmatpush1.bf16.msra.mxu0 0
      %415 = vmatprep.subr.bf16.mxu0 0
      %416 = vmatpush1.bf16.msra.mxu0 0
      %417 = vmatprep.mubr.bf16.mxu0 0
      %418 = vmatmul.mubr.bf16.gmra.mrb[0].mxu0 %v377
      %v419 = vpop.f32.mrb[0].mxu0
      %v420 = vadd.f32 0.0, %v419
      %v421 = vpop.f32.mrb[0].mxu0
      %v422 = vpop.f32.mrb[0].mxu0
      %v423 = vadd.f32 0.0, %v422
      %v424 = vpop.f32.mrb[0].mxu0
      %425 = vmatprep.mubr.bf16.mxu0 0
      %426 = vmatmul.mubr.bf16.gmra.mrb[0].mxu0 %v380
      %v427 = vpop.f32.mrb[0].mxu0
      %v428 = vadd.f32 0.0, %v427
      %v429 = vpop.f32.mrb[0].mxu0
      %v430 = vpop.f32.mrb[0].mxu0
      %v431 = vadd.f32 0.0, %v430
      %v432 = vpop.f32.mrb[0].mxu0
      %433 = vmatprep.mubr.bf16.mxu0 0
      %434 = vmatmul.mubr.bf16.gmra.mrb[0].mxu0 %v383
      %v435 = vpop.f32.mrb[0].mxu0
      %v436 = vadd.f32 0.0, %v435
      %v437 = vpop.f32.mrb[0].mxu0
      %v438 = vpop.f32.mrb[0].mxu0
      %v439 = vadd.f32 0.0, %v438
      %v440 = vpop.f32.mrb[0].mxu0
      %441 = vdwg.mxu0
      %v442 = vpack.c.bf16 %v423, %v420
      %v443 = vpack.c.bf16 %v431, %v428
      %v444 = vpack.c.bf16 %v439, %v436
      %v446 = vlaneseq
      %v447 = vshrl.u32 %v446, 7
      %v448 = vsub.s32 0, %v447
      %v449 = vrot.slane %v341, %v448
      %v450 = vlaneseq
      %v451 = vshrl.u32 %v450, 7
      %v452 = vsub.s32 1, %v451
      %v453 = vrot.slane %v341, %v452
      %v458 = vunpack.c.l.b16 %v339
      %v459 = vunpack.c.h.b16 %v339
      %v460 = vunpack.c.l.b16 %v340
      %v461 = vunpack.c.h.b16 %v340
      %v462 = vpack.c.b16 %v460, %v458
      %v463 = vpack.c.b16 %v461, %v459
      %vm466 = vcmask 130048
      %v468 = vsel %vm466, %v442, 0
      %v471 = vsel %vm466, %v443, 0
      %v474 = vsel %vm466, %v444, 0
      %476 = vmatprep.subr.bf16.mxu0 %v463
      %477 = vmatpush1.bf16.msra.mxu0 %v462
      %478 = vmatprep.subr.bf16.mxu0 0
      %479 = vmatpush1.bf16.msra.mxu0 0
      %480 = vmatprep.subr.bf16.mxu0 0
      %481 = vmatpush1.bf16.msra.mxu0 0
      %482 = vmatprep.subr.bf16.mxu0 0
      %483 = vmatpush1.bf16.msra.mxu0 0
      %484 = vmatprep.subr.bf16.mxu0 0
      %485 = vmatpush1.bf16.msra.mxu0 0
      %486 = vmatprep.subr.bf16.mxu0 0
      %487 = vmatpush1.bf16.msra.mxu0 0
      %488 = vmatprep.subr.bf16.mxu0 0
      %489 = vmatpush1.bf16.msra.mxu0 0
      %490 = vmatprep.subr.bf16.mxu0 0
      %491 = vmatpush1.bf16.msra.mxu0 0
      %492 = vmatprep.subr.bf16.mxu0 0
      %493 = vmatpush1.bf16.msra.mxu0 0
      %494 = vmatprep.subr.bf16.mxu0 0
      %495 = vmatpush1.bf16.msra.mxu0 0
      %496 = vmatprep.subr.bf16.mxu0 0
      %497 = vmatpush1.bf16.msra.mxu0 0
      %498 = vmatprep.subr.bf16.mxu0 0
      %499 = vmatpush1.bf16.msra.mxu0 0
      %500 = vmatprep.subr.bf16.mxu0 0
      %501 = vmatpush1.bf16.msra.mxu0 0
      %502 = vmatprep.subr.bf16.mxu0 0
      %503 = vmatpush1.bf16.msra.mxu0 0
      %504 = vmatprep.subr.bf16.mxu0 0
      %505 = vmatpush1.bf16.msra.mxu0 0
      %506 = vmatprep.subr.bf16.mxu0 0
      %507 = vmatpush1.bf16.msra.mxu0 0
      %508 = vmatprep.mubr.bf16.mxu0 0
      %509 = vmatmul.mubr.bf16.gmra.mrb[0].mxu0 %v468
      %v510 = vpop.f32.mrb[0].mxu0
      %v511 = vadd.f32 %v449, %v510
      %v512 = vpop.f32.mrb[0].mxu0
      %v513 = vadd.f32 %v453, %v512
      %v514 = vpop.f32.mrb[0].mxu0
      %v515 = vadd.f32 %v449, %v514
      %v516 = vpop.f32.mrb[0].mxu0
      %v517 = vadd.f32 %v453, %v516
      %518 = vmatprep.mubr.bf16.mxu0 0
      %519 = vmatmul.mubr.bf16.gmra.mrb[0].mxu0 %v471
      %v520 = vpop.f32.mrb[0].mxu0
      %v521 = vadd.f32 %v449, %v520
      %v522 = vpop.f32.mrb[0].mxu0
      %v523 = vadd.f32 %v453, %v522
      %v524 = vpop.f32.mrb[0].mxu0
      %v525 = vadd.f32 %v449, %v524
      %v526 = vpop.f32.mrb[0].mxu0
      %v527 = vadd.f32 %v453, %v526
      %528 = vmatprep.mubr.bf16.mxu0 0
      %529 = vmatmul.mubr.bf16.gmra.mrb[0].mxu0 %v474
      %v530 = vpop.f32.mrb[0].mxu0
      %v531 = vadd.f32 %v449, %v530
      %v532 = vpop.f32.mrb[0].mxu0
      %v533 = vadd.f32 %v453, %v532
      %v534 = vpop.f32.mrb[0].mxu0
      %v535 = vadd.f32 %v449, %v534
      %v536 = vpop.f32.mrb[0].mxu0
      %v537 = vadd.f32 %v453, %v536
      %538 = vdwg.mxu0
      %v539 = vsub.f32 0.0, %v513
      %v540 = vsub.f32 0.0, %v517
      %v541 = vsub.f32 0.0, %v523
      %v542 = vsub.f32 0.0, %v527
      %v543 = vsub.f32 0.0, %v533
      %v544 = vsub.f32 0.0, %v537
      %v545 = vmul.f32 %v539, 1.442695
      %v546 = vpow.pop %v545
      %v547 = vmul.f32 %v540, 1.442695
      %v548 = vpow.pop %v547
      %v549 = vmul.f32 %v541, 1.442695
      %v550 = vpow.pop %v549
      %v551 = vmul.f32 %v542, 1.442695
      %v552 = vpow.pop %v551
      %v553 = vmul.f32 %v543, 1.442695
      %v554 = vpow.pop %v553
      %v555 = vmul.f32 %v544, 1.442695
      %v556 = vpow.pop %v555
      %v557 = vadd.f32 %v546, 1.0
      %v558 = vadd.f32 %v548, 1.0
      %v559 = vadd.f32 %v550, 1.0
      %v560 = vadd.f32 %v552, 1.0
      %v561 = vadd.f32 %v554, 1.0
      %v562 = vadd.f32 %v556, 1.0
      %v563 = vrcp.pop %v557
      %v564 = vrcp.pop %v558
      %v565 = vrcp.pop %v559
      %v566 = vrcp.pop %v560
      %v567 = vrcp.pop %v561
      %v568 = vrcp.pop %v562
      %v569 = vmul.f32 %v511, %v563
      %v570 = vmul.f32 %v515, %v564
      %v571 = vmul.f32 %v521, %v565
      %v572 = vmul.f32 %v525, %v566
      %v573 = vmul.f32 %v531, %v567
      %v574 = vmul.f32 %v535, %v568
      %v575 = vpack.c.bf16 %v570, %v569
      %v576 = vpack.c.bf16 %v572, %v571
      %v577 = vpack.c.bf16 %v574, %v573
      %v578 = vld [vmem:[%s316] sm:$0xff]
      %v579 = vld [vmem:[%s316 + $0x8] sm:$0xff]
      %v580 = vld [vmem:[%s316 + $0x10] sm:$0xff]
      %v581 = vld [vmem:[%s316 + $0x18] sm:$0xff]
      %v582 = vld [vmem:[%s316 + $0x20] sm:$0xff]
      %v583 = vld [vmem:[%s316 + $0x28] sm:$0xff]
      %v584 = vld [vmem:[%s316 + $0x30] sm:$0xff]
      %v585 = vld [vmem:[%s316 + $0x38] sm:$0xff]
      %v586 = vld [vmem:[%s316 + $0x40] sm:$0xff]
      %v587 = vld [vmem:[%s316 + $0x48] sm:$0xff]
      %v588 = vld [vmem:[%s316 + $0x50] sm:$0xff]
      %v589 = vld [vmem:[%s316 + $0x58] sm:$0xff]
      %v590 = vld [vmem:[%s316 + $0x60] sm:$0xff]
      %v591 = vld [vmem:[%s316 + $0x68] sm:$0xff]
      %v592 = vld [vmem:[%s316 + $0x70] sm:$0xff]
      %v593 = vld [vmem:[%s316 + $0x78] sm:$0xff]
      %v594 = vld [vmem:[%s320] sm:$0x3]
      %595 = vmatprep.subr.bf16.mxu0 0
      %596 = vmatpush1.bf16.msra.mxu0 %v575
      %597 = vmatprep.subr.bf16.mxu0 0
      %598 = vmatpush1.bf16.msra.mxu0 %v576
      %599 = vmatprep.subr.bf16.mxu0 0
      %600 = vmatpush1.bf16.msra.mxu0 %v577
      %601 = vmatprep.subr.bf16.mxu0 0
      %602 = vmatpush1.bf16.msra.mxu0 0
      %603 = vmatprep.subr.bf16.mxu0 0
      %604 = vmatpush1.bf16.msra.mxu0 0
      %605 = vmatprep.subr.bf16.mxu0 0
      %606 = vmatpush1.bf16.msra.mxu0 0
      %607 = vmatprep.subr.bf16.mxu0 0
      %608 = vmatpush1.bf16.msra.mxu0 0
      %609 = vmatprep.subr.bf16.mxu0 0
      %610 = vmatpush1.bf16.msra.mxu0 0
      %611 = vmatprep.subr.bf16.mxu0 0
      %612 = vmatpush1.bf16.msra.mxu0 0
      %613 = vmatprep.subr.bf16.mxu0 0
      %614 = vmatpush1.bf16.msra.mxu0 0
      %615 = vmatprep.subr.bf16.mxu0 0
      %616 = vmatpush1.bf16.msra.mxu0 0
      %617 = vmatprep.subr.bf16.mxu0 0
      %618 = vmatpush1.bf16.msra.mxu0 0
      %619 = vmatprep.subr.bf16.mxu0 0
      %620 = vmatpush1.bf16.msra.mxu0 0
      %621 = vmatprep.subr.bf16.mxu0 0
      %622 = vmatpush1.bf16.msra.mxu0 0
      %623 = vmatprep.subr.bf16.mxu0 0
      %624 = vmatpush1.bf16.msra.mxu0 0
      %625 = vmatprep.subr.bf16.mxu0 0
      %626 = vmatpush1.bf16.msra.mxu0 0
      %627 = vmatprep.mubr.bf16.mxu0 0
      %628 = vmatmul.mubr.bf16.gmra.mrb[0].mxu0 %v377
      %v629 = vpop.f32.mrb[0].mxu0
      %v630 = vadd.f32 0.0, %v629
      %v631 = vpop.f32.mrb[0].mxu0
      %v632 = vpop.f32.mrb[0].mxu0
      %v633 = vadd.f32 0.0, %v632
      %v634 = vpop.f32.mrb[0].mxu0
      %635 = vmatprep.mubr.bf16.mxu0 0
      %636 = vmatmul.mubr.bf16.gmra.mrb[0].mxu0 %v380
      %v637 = vpop.f32.mrb[0].mxu0
      %v638 = vadd.f32 0.0, %v637
      %v639 = vpop.f32.mrb[0].mxu0
      %v640 = vpop.f32.mrb[0].mxu0
      %v641 = vadd.f32 0.0, %v640
      %v642 = vpop.f32.mrb[0].mxu0
      %643 = vmatprep.mubr.bf16.mxu0 0
      %644 = vmatmul.mubr.bf16.gmra.mrb[0].mxu0 %v383
      %v645 = vpop.f32.mrb[0].mxu0
      %v646 = vadd.f32 0.0, %v645
      %v647 = vpop.f32.mrb[0].mxu0
      %v648 = vpop.f32.mrb[0].mxu0
      %v649 = vadd.f32 0.0, %v648
      %v650 = vpop.f32.mrb[0].mxu0
      %651 = vdwg.mxu0
      %v652 = vpack.c.bf16 %v633, %v630
      %v653 = vpack.c.bf16 %v641, %v638
      %v654 = vpack.c.bf16 %v649, %v646
      %v656 = vlaneseq
      %v657 = vshrl.u32 %v656, 7
      %v658 = vsub.s32 0, %v657
      %v659 = vrot.slane %v594, %v658
      %v660 = vlaneseq
      %v661 = vshrl.u32 %v660, 7
      %v662 = vsub.s32 1, %v661
      %v663 = vrot.slane %v594, %v662
      %v682 = vunpack.c.l.b16 %v578
      %v683 = vunpack.c.h.b16 %v578
      %v684 = vunpack.c.l.b16 %v579
      %v685 = vunpack.c.h.b16 %v579
      %v686 = vunpack.c.l.b16 %v580
      %v687 = vunpack.c.h.b16 %v580
      %v688 = vunpack.c.l.b16 %v581
      %v689 = vunpack.c.h.b16 %v581
      %v690 = vunpack.c.l.b16 %v582
      %v691 = vunpack.c.h.b16 %v582
      %v692 = vunpack.c.l.b16 %v583
      %v693 = vunpack.c.h.b16 %v583
      %v694 = vunpack.c.l.b16 %v584
      %v695 = vunpack.c.h.b16 %v584
      %v696 = vunpack.c.l.b16 %v585
      %v697 = vunpack.c.h.b16 %v585
      %v698 = vunpack.c.l.b16 %v586
      %v699 = vunpack.c.h.b16 %v586
      %v700 = vunpack.c.l.b16 %v587
      %v701 = vunpack.c.h.b16 %v587
      %v702 = vunpack.c.l.b16 %v588
      %v703 = vunpack.c.h.b16 %v588
      %v704 = vunpack.c.l.b16 %v589
      %v705 = vunpack.c.h.b16 %v589
      %v706 = vunpack.c.l.b16 %v590
      %v707 = vunpack.c.h.b16 %v590
      %v708 = vunpack.c.l.b16 %v591
      %v709 = vunpack.c.h.b16 %v591
      %v710 = vunpack.c.l.b16 %v592
      %v711 = vunpack.c.h.b16 %v592
      %v712 = vunpack.c.l.b16 %v593
      %v713 = vunpack.c.h.b16 %v593
      %v714 = vpack.c.b16 %v684, %v682
      %v715 = vpack.c.b16 %v685, %v683
      %v716 = vpack.c.b16 %v688, %v686
      %v717 = vpack.c.b16 %v689, %v687
      %v718 = vpack.c.b16 %v692, %v690
      %v719 = vpack.c.b16 %v693, %v691
      %v720 = vpack.c.b16 %v696, %v694
      %v721 = vpack.c.b16 %v697, %v695
      %v722 = vpack.c.b16 %v700, %v698
      %v723 = vpack.c.b16 %v701, %v699
      %v724 = vpack.c.b16 %v704, %v702
      %v725 = vpack.c.b16 %v705, %v703
      %v726 = vpack.c.b16 %v708, %v706
      %v727 = vpack.c.b16 %v709, %v707
      %v728 = vpack.c.b16 %v712, %v710
      %v729 = vpack.c.b16 %v713, %v711
      %746 = vmatprep.subr.bf16.mxu0 %v715
      %747 = vmatpush1.bf16.msra.mxu0 %v714
      %748 = vmatprep.subr.bf16.mxu0 %v717
      %749 = vmatpush1.bf16.msra.mxu0 %v716
      %750 = vmatprep.subr.bf16.mxu0 %v719
      %751 = vmatpush1.bf16.msra.mxu0 %v718
      %752 = vmatprep.subr.bf16.mxu0 %v721
      %753 = vmatpush1.bf16.msra.mxu0 %v720
      %754 = vmatprep.subr.bf16.mxu0 %v723
      %755 = vmatpush1.bf16.msra.mxu0 %v722
      %756 = vmatprep.subr.bf16.mxu0 %v725
      %757 = vmatpush1.bf16.msra.mxu0 %v724
      %758 = vmatprep.subr.bf16.mxu0 %v727
      %759 = vmatpush1.bf16.msra.mxu0 %v726
      %760 = vmatprep.subr.bf16.mxu0 %v729
      %761 = vmatpush1.bf16.msra.mxu0 %v728
      %762 = vmatprep.subr.bf16.mxu0 0
      %763 = vmatpush1.bf16.msra.mxu0 0
      %764 = vmatprep.subr.bf16.mxu0 0
      %765 = vmatpush1.bf16.msra.mxu0 0
      %766 = vmatprep.subr.bf16.mxu0 0
      %767 = vmatpush1.bf16.msra.mxu0 0
      %768 = vmatprep.subr.bf16.mxu0 0
      %769 = vmatpush1.bf16.msra.mxu0 0
      %770 = vmatprep.subr.bf16.mxu0 0
      %771 = vmatpush1.bf16.msra.mxu0 0
      %772 = vmatprep.subr.bf16.mxu0 0
      %773 = vmatpush1.bf16.msra.mxu0 0
      %774 = vmatprep.subr.bf16.mxu0 0
      %775 = vmatpush1.bf16.msra.mxu0 0
      %776 = vmatprep.subr.bf16.mxu0 0
      %777 = vmatpush1.bf16.msra.mxu0 0
      %778 = vmatprep.mubr.bf16.mxu0 0
      %779 = vmatmul.mubr.bf16.gmra.mrb[0].mxu0 %v652
      %v780 = vpop.f32.mrb[0].mxu0
      %v781 = vadd.f32 %v659, %v780
      %v782 = vpop.f32.mrb[0].mxu0
      %v783 = vadd.f32 %v663, %v782
      %v784 = vpop.f32.mrb[0].mxu0
      %v785 = vadd.f32 %v659, %v784
      %v786 = vpop.f32.mrb[0].mxu0
      %v787 = vadd.f32 %v663, %v786
      %788 = vmatprep.mubr.bf16.mxu0 0
      %789 = vmatmul.mubr.bf16.gmra.mrb[0].mxu0 %v653
      %v790 = vpop.f32.mrb[0].mxu0
      %v791 = vadd.f32 %v659, %v790
      %v792 = vpop.f32.mrb[0].mxu0
      %v793 = vadd.f32 %v663, %v792
      %v794 = vpop.f32.mrb[0].mxu0
      %v795 = vadd.f32 %v659, %v794
      %v796 = vpop.f32.mrb[0].mxu0
      %v797 = vadd.f32 %v663, %v796
      %798 = vmatprep.mubr.bf16.mxu0 0
      %799 = vmatmul.mubr.bf16.gmra.mrb[0].mxu0 %v654
      %v800 = vpop.f32.mrb[0].mxu0
      %v801 = vadd.f32 %v659, %v800
      %v802 = vpop.f32.mrb[0].mxu0
      %v803 = vadd.f32 %v663, %v802
      %v804 = vpop.f32.mrb[0].mxu0
      %v805 = vadd.f32 %v659, %v804
      %v806 = vpop.f32.mrb[0].mxu0
      %v807 = vadd.f32 %v663, %v806
      %808 = vdwg.mxu0
      %v809 = vsub.f32 0.0, %v783
      %v810 = vsub.f32 0.0, %v787
      %v811 = vsub.f32 0.0, %v793
      %v812 = vsub.f32 0.0, %v797
      %v813 = vsub.f32 0.0, %v803
      %v814 = vsub.f32 0.0, %v807
      %v815 = vmul.f32 %v809, 1.442695
      %v816 = vpow.pop %v815
      %v817 = vmul.f32 %v810, 1.442695
      %v818 = vpow.pop %v817
      %v819 = vmul.f32 %v811, 1.442695
      %v820 = vpow.pop %v819
      %v821 = vmul.f32 %v812, 1.442695
      %v822 = vpow.pop %v821
      %v823 = vmul.f32 %v813, 1.442695
      %v824 = vpow.pop %v823
      %v825 = vmul.f32 %v814, 1.442695
      %v826 = vpow.pop %v825
      %v827 = vadd.f32 %v816, 1.0
      %v828 = vadd.f32 %v818, 1.0
      %v829 = vadd.f32 %v820, 1.0
      %v830 = vadd.f32 %v822, 1.0
      %v831 = vadd.f32 %v824, 1.0
      %v832 = vadd.f32 %v826, 1.0
      %v833 = vrcp.pop %v827
      %v834 = vrcp.pop %v828
      %v835 = vrcp.pop %v829
      %v836 = vrcp.pop %v830
      %v837 = vrcp.pop %v831
      %v838 = vrcp.pop %v832
      %v839 = vmul.f32 %v781, %v833
      %v840 = vmul.f32 %v785, %v834
      %v841 = vmul.f32 %v791, %v835
      %v842 = vmul.f32 %v795, %v836
      %v843 = vmul.f32 %v801, %v837
      %v844 = vmul.f32 %v805, %v838
      %v845 = vmax.f32 %v571, %v841
      %v846 = vmax.f32 %v572, %v842
      %v847 = vpack.c.bf16 %v840, %v839
      %v848 = vpack.c.bf16 %v842, %v841
      %v849 = vpack.c.bf16 %v844, %v843
      %s850 = scalar_lea.vmem %s316, 128
      %v851 = vld [vmem:[%s850] sm:$0xff]
      %v852 = vld [vmem:[%s850 + $0x8] sm:$0xff]
      %v853 = vld [vmem:[%s850 + $0x10] sm:$0xff]
      %v854 = vld [vmem:[%s850 + $0x18] sm:$0xff]
      %v855 = vld [vmem:[%s850 + $0x20] sm:$0xff]
      %v856 = vld [vmem:[%s850 + $0x28] sm:$0xff]
      %v857 = vld [vmem:[%s850 + $0x30] sm:$0xff]
      %v858 = vld [vmem:[%s850 + $0x38] sm:$0xff]
      %v859 = vld [vmem:[%s850 + $0x40] sm:$0xff]
      %v860 = vld [vmem:[%s850 + $0x48] sm:$0xff]
      %v861 = vld [vmem:[%s850 + $0x50] sm:$0xff]
      %v862 = vld [vmem:[%s850 + $0x58] sm:$0xff]
      %v863 = vld [vmem:[%s850 + $0x60] sm:$0xff]
      %v864 = vld [vmem:[%s850 + $0x68] sm:$0xff]
      %v865 = vld [vmem:[%s850 + $0x70] sm:$0xff]
      %v866 = vld [vmem:[%s850 + $0x78] sm:$0xff]
      %s867 = scalar_lea.vmem %s320, 2
      %v868 = vld [vmem:[%s867] sm:$0x3]
      %869 = vmatprep.subr.bf16.mxu0 0
      %870 = vmatpush1.bf16.msra.mxu0 %v847
      %871 = vmatprep.subr.bf16.mxu0 0
      %872 = vmatpush1.bf16.msra.mxu0 %v848
      %873 = vmatprep.subr.bf16.mxu0 0
      %874 = vmatpush1.bf16.msra.mxu0 %v849
      %875 = vmatprep.subr.bf16.mxu0 0
      %876 = vmatpush1.bf16.msra.mxu0 0
      %877 = vmatprep.subr.bf16.mxu0 0
      %878 = vmatpush1.bf16.msra.mxu0 0
      %879 = vmatprep.subr.bf16.mxu0 0
      %880 = vmatpush1.bf16.msra.mxu0 0
      %881 = vmatprep.subr.bf16.mxu0 0
      %882 = vmatpush1.bf16.msra.mxu0 0
      %883 = vmatprep.subr.bf16.mxu0 0
      %884 = vmatpush1.bf16.msra.mxu0 0
      %885 = vmatprep.subr.bf16.mxu0 0
      %886 = vmatpush1.bf16.msra.mxu0 0
      %887 = vmatprep.subr.bf16.mxu0 0
      %888 = vmatpush1.bf16.msra.mxu0 0
      %889 = vmatprep.subr.bf16.mxu0 0
      %890 = vmatpush1.bf16.msra.mxu0 0
      %891 = vmatprep.subr.bf16.mxu0 0
      %892 = vmatpush1.bf16.msra.mxu0 0
      %893 = vmatprep.subr.bf16.mxu0 0
      %894 = vmatpush1.bf16.msra.mxu0 0
      %895 = vmatprep.subr.bf16.mxu0 0
      %896 = vmatpush1.bf16.msra.mxu0 0
      %897 = vmatprep.subr.bf16.mxu0 0
      %898 = vmatpush1.bf16.msra.mxu0 0
      %899 = vmatprep.subr.bf16.mxu0 0
      %900 = vmatpush1.bf16.msra.mxu0 0
      %901 = vmatprep.mubr.bf16.mxu0 0
      %902 = vmatmul.mubr.bf16.gmra.mrb[0].mxu0 %v377
      %v903 = vpop.f32.mrb[0].mxu0
      %v904 = vadd.f32 0.0, %v903
      %v905 = vpop.f32.mrb[0].mxu0
      %v906 = vpop.f32.mrb[0].mxu0
      %v907 = vadd.f32 0.0, %v906
      %v908 = vpop.f32.mrb[0].mxu0
      %909 = vmatprep.mubr.bf16.mxu0 0
      %910 = vmatmul.mubr.bf16.gmra.mrb[0].mxu0 %v380
      %v911 = vpop.f32.mrb[0].mxu0
      %v912 = vadd.f32 0.0, %v911
      %v913 = vpop.f32.mrb[0].mxu0
      %v914 = vpop.f32.mrb[0].mxu0
      %v915 = vadd.f32 0.0, %v914
      %v916 = vpop.f32.mrb[0].mxu0
      %917 = vmatprep.mubr.bf16.mxu0 0
      %918 = vmatmul.mubr.bf16.gmra.mrb[0].mxu0 %v383
      %v919 = vpop.f32.mrb[0].mxu0
      %v920 = vadd.f32 0.0, %v919
      %v921 = vpop.f32.mrb[0].mxu0
      %v922 = vpop.f32.mrb[0].mxu0
      %v923 = vadd.f32 0.0, %v922
      %v924 = vpop.f32.mrb[0].mxu0
      %925 = vdwg.mxu0
      %v926 = vpack.c.bf16 %v907, %v904
      %v927 = vpack.c.bf16 %v915, %v912
      %v928 = vpack.c.bf16 %v923, %v920
      %v930 = vlaneseq
      %v931 = vshrl.u32 %v930, 7
      %v932 = vsub.s32 0, %v931
      %v933 = vrot.slane %v868, %v932
      %v934 = vlaneseq
      %v935 = vshrl.u32 %v934, 7
      %v936 = vsub.s32 1, %v935
      %v937 = vrot.slane %v868, %v936
      %v956 = vunpack.c.l.b16 %v851
      %v957 = vunpack.c.h.b16 %v851
      %v958 = vunpack.c.l.b16 %v852
      %v959 = vunpack.c.h.b16 %v852
      %v960 = vunpack.c.l.b16 %v853
      %v961 = vunpack.c.h.b16 %v853
      %v962 = vunpack.c.l.b16 %v854
      %v963 = vunpack.c.h.b16 %v854
      %v964 = vunpack.c.l.b16 %v855
      %v965 = vunpack.c.h.b16 %v855
      %v966 = vunpack.c.l.b16 %v856
      %v967 = vunpack.c.h.b16 %v856
      %v968 = vunpack.c.l.b16 %v857
      %v969 = vunpack.c.h.b16 %v857
      %v970 = vunpack.c.l.b16 %v858
      %v971 = vunpack.c.h.b16 %v858
      %v972 = vunpack.c.l.b16 %v859
      %v973 = vunpack.c.h.b16 %v859
      %v974 = vunpack.c.l.b16 %v860
      %v975 = vunpack.c.h.b16 %v860
      %v976 = vunpack.c.l.b16 %v861
      %v977 = vunpack.c.h.b16 %v861
      %v978 = vunpack.c.l.b16 %v862
      %v979 = vunpack.c.h.b16 %v862
      %v980 = vunpack.c.l.b16 %v863
      %v981 = vunpack.c.h.b16 %v863
      %v982 = vunpack.c.l.b16 %v864
      %v983 = vunpack.c.h.b16 %v864
      %v984 = vunpack.c.l.b16 %v865
      %v985 = vunpack.c.h.b16 %v865
      %v986 = vunpack.c.l.b16 %v866
      %v987 = vunpack.c.h.b16 %v866
      %v988 = vpack.c.b16 %v958, %v956
      %v989 = vpack.c.b16 %v959, %v957
      %v990 = vpack.c.b16 %v962, %v960
      %v991 = vpack.c.b16 %v963, %v961
      %v992 = vpack.c.b16 %v966, %v964
      %v993 = vpack.c.b16 %v967, %v965
      %v994 = vpack.c.b16 %v970, %v968
      %v995 = vpack.c.b16 %v971, %v969
      %v996 = vpack.c.b16 %v974, %v972
      %v997 = vpack.c.b16 %v975, %v973
      %v998 = vpack.c.b16 %v978, %v976
      %v999 = vpack.c.b16 %v979, %v977
      %v1000 = vpack.c.b16 %v982, %v980
      %v1001 = vpack.c.b16 %v983, %v981
      %v1002 = vpack.c.b16 %v986, %v984
      %v1003 = vpack.c.b16 %v987, %v985
      %1020 = vmatprep.subr.bf16.mxu0 %v989
      %1021 = vmatpush1.bf16.msra.mxu0 %v988
      %1022 = vmatprep.subr.bf16.mxu0 %v991
      %1023 = vmatpush1.bf16.msra.mxu0 %v990
      %1024 = vmatprep.subr.bf16.mxu0 %v993
      %1025 = vmatpush1.bf16.msra.mxu0 %v992
      %1026 = vmatprep.subr.bf16.mxu0 %v995
      %1027 = vmatpush1.bf16.msra.mxu0 %v994
      %1028 = vmatprep.subr.bf16.mxu0 %v997
      %1029 = vmatpush1.bf16.msra.mxu0 %v996
      %1030 = vmatprep.subr.bf16.mxu0 %v999
      %1031 = vmatpush1.bf16.msra.mxu0 %v998
      %1032 = vmatprep.subr.bf16.mxu0 %v1001
      %1033 = vmatpush1.bf16.msra.mxu0 %v1000
      %1034 = vmatprep.subr.bf16.mxu0 %v1003
      %1035 = vmatpush1.bf16.msra.mxu0 %v1002
      %1036 = vmatprep.subr.bf16.mxu0 0
      %1037 = vmatpush1.bf16.msra.mxu0 0
      %1038 = vmatprep.subr.bf16.mxu0 0
      %1039 = vmatpush1.bf16.msra.mxu0 0
      %1040 = vmatprep.subr.bf16.mxu0 0
      %1041 = vmatpush1.bf16.msra.mxu0 0
      %1042 = vmatprep.subr.bf16.mxu0 0
      %1043 = vmatpush1.bf16.msra.mxu0 0
      %1044 = vmatprep.subr.bf16.mxu0 0
      %1045 = vmatpush1.bf16.msra.mxu0 0
      %1046 = vmatprep.subr.bf16.mxu0 0
      %1047 = vmatpush1.bf16.msra.mxu0 0
      %1048 = vmatprep.subr.bf16.mxu0 0
      %1049 = vmatpush1.bf16.msra.mxu0 0
      %1050 = vmatprep.subr.bf16.mxu0 0
      %1051 = vmatpush1.bf16.msra.mxu0 0
      %1052 = vmatprep.mubr.bf16.mxu0 0
      %1053 = vmatmul.mubr.bf16.gmra.mrb[0].mxu0 %v926
      %v1054 = vpop.f32.mrb[0].mxu0
      %v1055 = vpop.f32.mrb[0].mxu0
      %v1056 = vpop.f32.mrb[0].mxu0
      %v1057 = vpop.f32.mrb[0].mxu0
      %1058 = vmatprep.mubr.bf16.mxu0 0
      %1059 = vmatmul.mubr.bf16.gmra.mrb[0].mxu0 %v927
      %v1060 = vpop.f32.mrb[0].mxu0
      %v1061 = vadd.f32 %v933, %v1060
      %v1062 = vpop.f32.mrb[0].mxu0
      %v1063 = vadd.f32 %v937, %v1062
      %v1064 = vpop.f32.mrb[0].mxu0
      %v1065 = vadd.f32 %v933, %v1064
      %v1066 = vpop.f32.mrb[0].mxu0
      %v1067 = vadd.f32 %v937, %v1066
      %1068 = vmatprep.mubr.bf16.mxu0 0
      %1069 = vmatmul.mubr.bf16.gmra.mrb[0].mxu0 %v928
      %v1070 = vpop.f32.mrb[0].mxu0
      %v1071 = vpop.f32.mrb[0].mxu0
      %v1072 = vpop.f32.mrb[0].mxu0
      %v1073 = vpop.f32.mrb[0].mxu0
      %1074 = vdwg.mxu0
      %v1075 = vsub.f32 0.0, %v1063
      %v1076 = vsub.f32 0.0, %v1067
      %v1077 = vmul.f32 %v1075, 1.442695
      %v1078 = vpow.pop %v1077
      %v1079 = vmul.f32 %v1076, 1.442695
      %v1080 = vpow.pop %v1079
      %v1081 = vadd.f32 %v1078, 1.0
      %v1082 = vadd.f32 %v1080, 1.0
      %v1083 = vrcp.pop %v1081
      %v1084 = vrcp.pop %v1082
      %v1085 = vmul.f32 %v1061, %v1083
      %v1086 = vmul.f32 %v1065, %v1084
      %v1087 = vmax.f32 %v845, %v1085
      %v1088 = vmax.f32 %v846, %v1086
      %1089 = vst [vmem:[%s325] sm:$0xff] %v1087
      %1090 = vst [vmem:[%s325 + $0x8] sm:$0xff] %v1088
      %p1091 = scmp.lt.s32.totalorder %s17, 1
      %s1092 = scalar_select %p1091, %s17, 1
      %s1093 = smul.addr %s1092, 2
      %s1094 = smul.addr %s1093, 8
      %s1095 = scalar_lea.vmem %s6, %s1094
      // Predicated region
      $region45: #{_lambda_.1} parent=43 // pred_check
        %p1096 = pneg %p186
      $region46: #{_lambda_.1} parent=43 // pred_check_branch
        %1098 = sbr.rel (%p1096) target = $region48
      $region47: #{_lambda_.1} parent=43 // pred_region
        _
      $region48: #{_lambda_.1} parent=43 // pred_fallthru
        _
    $region44: #{_lambda_.1} parent=5 // pred_fallthru
      _
    %p1099 = scmp.le.s32.totalorder 2, %s12
    // Predicated region
    $region49: #{_lambda_.1} parent=5 // pred_check
      %p1100 = pneg %p1099
    $region50: #{_lambda_.1} parent=5 // pred_check_branch
      %1102 = sbr.rel (%p1100) target = $region52
    $region51: #{_lambda_.1} parent=5 // pred_region
      %s1103 = ssub.s32 %s12, 2
      // Predicated region
      $region53: #{_lambda_.1} parent=51 // pred_check
        %p1104 = pneg %p192
      $region54: #{_lambda_.1} parent=51 // pred_check_branch
        %1106 = sbr.rel (%p1104) target = $region56
      $region55: #{_lambda_.1} parent=51 // pred_region
        %p1107 = scmp.lt.s32.totalorder %s18, 1
        %s1108 = scalar_select %p1107, %s18, 1
        %s1109 = smul.addr %s1108, 2
        %s1110 = smul.addr %s1109, 8
        %s1111 = scalar_lea.vmem %s6, %s1110
      $region56: #{_lambda_.1} parent=51 // pred_fallthru
        _
    $region52: #{_lambda_.1} parent=5 // pred_fallthru
      _
  $region6: #{_lambda_.1} parent=0 // loop_footer
    %s16 = sadd.s32 1, %s12
  $region7: #{_lambda_.1} parent=0 // loop_footer_branch
    %11 = sbr.rel target = $region3
  $region8: #{_lambda_.1} parent=0 // loop_exit
    _

</llo_original>
